<compile_context>
chip_gen: v7x
topology: tpu7x:2x2x1
jax: 0.10.0
libtpu: 0.0.40
codegen_flags: <defaults>
</compile_context>

<pallas_src>
import functools
import math

import jax
import jax.numpy as jnp
from jax.experimental import pallas as pl
from jax.experimental.pallas import tpu as pltpu

_LANE = 128            # lane width: output/feature dims padded to this
_BF16_SUBLANE = 16     # sublane packing for bf16 second-minor dims


def _round_up(n, m):
    return ((n + m - 1) // m) * m


def _vmem_cap_bytes():
    """Usable VMEM budget for this chip generation (with headroom)."""
    try:
        phys = int(pltpu.get_tpu_info().vmem_capacity_bytes)
    except Exception:
        phys = 64 * 1024 * 1024        # conservative, v7x-sized fallback
    return int(phys * 0.85)


# --------------------------------------------------------------------------- #
# Kernel
# --------------------------------------------------------------------------- #
def _mlp_kernel(n_layers, *refs):
    """Fused MLP on one batch tile.

    refs = (x_ref, w0, b0, w1, b1, ..., w_{L-1}, b_{L-1}, out_ref)
    Hidden layers: ReLU (bf16 between layers); last layer: Sigmoid (f32).
    Weights are bf16, biases f32; every dot accumulates in f32 on the MXU.
    """
    x_ref = refs[0]
    out_ref = refs[-1]
    param_refs = refs[1:-1]

    h = x_ref[...]                                       # bf16 (tile_b, in_pad)
    for i in range(n_layers):
        w = param_refs[2 * i][...]                       # bf16 (k_pad, out_pad)
        b = param_refs[2 * i + 1][...]                   # f32  (1, out_pad)
        acc = jnp.dot(h, w, preferred_element_type=jnp.float32) + b
        if i < n_layers - 1:
            h = jnp.maximum(acc, 0.0).astype(jnp.bfloat16)   # nn.ReLU, keep bf16
        else:
            h = jax.nn.sigmoid(acc)                          # nn.Sigmoid, f32 (EUP)
    out_ref[...] = h.astype(out_ref.dtype)


# --------------------------------------------------------------------------- #
# One-time parameter packing (hoisted out of the forward pass)
# --------------------------------------------------------------------------- #
def pack_dense_net_params(params):
    """Pad / cast parameters once for the kernel; reuse across forward calls.

    params: list of (W, b) with W (in, out), b (out,) -- f32.
    Returns a dict with bf16 weights (padded), f32 biases (padded), and the
    true in/out feature sizes for slicing.
    """
    layers = []
    for i, (w, b) in enumerate(params):
        fi, fo = w.shape
        # First layer: K only needs bf16 sublane alignment (16).  Later layers:
        # K must match the previous layer's lane-dense (x128) output padding.
        k_align = _BF16_SUBLANE if i == 0 else _LANE
        fi_p = _round_up(fi, k_align)
        fo_p = _round_up(fo, _LANE)
        w_p = jnp.zeros((fi_p, fo_p), jnp.bfloat16).at[:fi, :fo].set(
            w.astype(jnp.bfloat16))
        b_p = jnp.zeros((1, fo_p), jnp.float32).at[:, :fo].set(
            b.reshape(1, -1).astype(jnp.float32))
        layers.append((w_p, b_p))
    return {
        "layers": layers,
        "in_features": params[0][0].shape[0],
        "out_features": params[-1][0].shape[1],
    }


# --------------------------------------------------------------------------- #
# Forward pass
# --------------------------------------------------------------------------- #
def dense_net_forward(x, packed, *, tile_b=256, out_dtype=jnp.float32):
    """DenseNet forward.

    x: (B, ...) -- flattened to (B, widths[0]) like nn.Flatten(1, -1).
    packed: output of pack_dense_net_params.
    tile_b: requested batch tile (rounded to a multiple of 16).
    out_dtype: f32 by default; pass jnp.bfloat16 to halve output DMA bytes.
    """
    layers = packed["layers"]
    in0 = packed["in_features"]
    out_dim = packed["out_features"]
    n_layers = len(layers)
    in0_pad = layers[0][0].shape[0]
    out_pad = layers[-1][0].shape[1]

    batch = x.shape[0]
    x2 = x.reshape(batch, -1)                            # nn.Flatten(1, -1) -- glue
    assert x2.shape[1] == in0, "input feature size must equal widths[0]"

    # ---- batch tile policy -------------------------------------------------
    tile_cap = _round_up(batch, _BF16_SUBLANE)
    tile_b = max(_BF16_SUBLANE, min(_round_up(tile_b, _BF16_SUBLANE), tile_cap))
    # v7x has 2 TensorCores: split the batch only when each half tile is still
    # big enough (>=256 rows) to amortize per-step overhead / MXU weight push.
    half = _round_up(pl.cdiv(batch, 2), _BF16_SUBLANE)
    if half >= 256 and tile_b > half:
        tile_b = half
    batch_pad = _round_up(batch, tile_b)

    # ---- x to bf16, pad only if needed ------------------------------------
    x_b = x2.astype(jnp.bfloat16)
    if (batch_pad, in0_pad) != (batch, in0):
        x_b = jnp.zeros((batch_pad, in0_pad), jnp.bfloat16).at[:batch, :in0].set(x_b)

    # ---- VMEM budget: single- vs double-buffered params --------------------
    out_itemsize = jnp.dtype(out_dtype).itemsize
    param_bytes = sum(int(w.size) * 2 + int(b.size) * 4 for w, b in layers)
    act_tile_bytes = tile_b * (in0_pad * 2 + out_pad * out_itemsize)
    max_width = max(w.shape[1] for w, _ in layers)
    scratch_bytes = tile_b * max_width * 4               # f32 acc / live h estimate
    vmem_cap = _vmem_cap_bytes()

    param_bufs = 2
    if 2 * act_tile_bytes + 2 * param_bytes + scratch_bytes > vmem_cap:
        param_bufs = 1                                    # weights never change block
    # Streaming weights layer-by-layer (emit_pipeline) would be the next fallback
    # if even single-buffered params exceed the budget; not needed at these sizes.

    needed = 2 * act_tile_bytes + param_bufs * param_bytes + scratch_bytes
    vmem_limit = int(min(max(needed * 1.3, 4 * 1024 * 1024), vmem_cap))

    # ---- specs: x/out tiled over batch; params VMEM-resident across grid ----
    in_specs = [pl.BlockSpec((tile_b, in0_pad), lambda i: (i, 0))]
    param_kwargs = {}
    if param_bufs == 1:
        param_kwargs["pipeline_mode"] = pl.Buffered(1)
    flat_params = []
    for w_p, b_p in layers:
        in_specs.append(pl.BlockSpec(w_p.shape, lambda i: (0, 0), **param_kwargs))
        in_specs.append(pl.BlockSpec(b_p.shape, lambda i: (0, 0), **param_kwargs))
        flat_params += [w_p, b_p]
    out_spec = pl.BlockSpec((tile_b, out_pad), lambda i: (i, 0))

    # ---- cost estimate (true dims for flops; actual DMA bytes) -------------
    flops = 2 * batch * sum(int(w.size) for w, _ in layers)
    bytes_accessed = (int(x_b.size) * 2 + param_bytes
                      + batch_pad * out_pad * out_itemsize)
    cost = pl.CostEstimate(flops=flops,
                           transcendentals=batch * out_dim,
                           bytes_accessed=bytes_accessed)

    kernel = functools.partial(_mlp_kernel, n_layers)
    out_p = pl.pallas_call(
        kernel,
        out_shape=jax.ShapeDtypeStruct((batch_pad, out_pad), out_dtype),
        grid=(batch_pad // tile_b,),
        in_specs=in_specs,
        out_specs=out_spec,
        compiler_params=pltpu.CompilerParams(
            dimension_semantics=("parallel",),           # megacore-shardable batch
            vmem_limit_bytes=vmem_limit),
        cost_estimate=cost,
    )(x_b, *flat_params)

    # Slice away batch / lane padding (padded output lanes hold sigmoid(0)=0.5).
    return out_p[:batch, :out_dim]


# --------------------------------------------------------------------------- #
# Parameter init (matches nn.Linear's U(-1/sqrt(fan_in), 1/sqrt(fan_in)))
# --------------------------------------------------------------------------- #
def init_dense_net_params(key, widths):
    params = []
    keys = jax.random.split(key, 2 * (len(widths) - 1))
    for i in range(len(widths) - 1):
        fan_in, fan_out = widths[i], widths[i + 1]
        bound = 1.0 / math.sqrt(fan_in)
        w = jax.random.uniform(keys[2 * i], (fan_in, fan_out),
                               minval=-bound, maxval=bound, dtype=jnp.float32)
        b = jax.random.uniform(keys[2 * i + 1], (fan_out,),
                               minval=-bound, maxval=bound, dtype=jnp.float32)
        params.append((w, b))
    return params


if __name__ == "__main__":
    key = jax.random.PRNGKey(0)
    k_x, k_p = jax.random.split(key)

    # widths[0] must equal the flattened input feature size (4*4*4 = 64).
    widths = [64, 128, 64, 8]
    batch = 64
    x = jax.random.normal(k_x, (batch, 4, 4, 4), dtype=jnp.float32)

    params = init_dense_net_params(k_p, widths)
    packed = pack_dense_net_params(params)       # one-time prep (hoisted)

    out = dense_net_forward(x, packed)           # default tile -> single grid step
    out = jax.block_until_ready(out)

    # Pure-JAX reference mirroring the kernel's bf16-activation / bf16-weight /
    # f32-accumulate / f32-bias math.
    ref = x.reshape(batch, -1).astype(jnp.bfloat16)
    for i, (w, b) in enumerate(params):
        acc = jnp.dot(ref, w.astype(jnp.bfloat16),
                      preferred_element_type=jnp.float32) + b
        if i < len(params) - 1:
            ref = jnp.maximum(acc, 0.0).astype(jnp.bfloat16)
        else:
            ref = jax.nn.sigmoid(acc)

    assert out.shape == (batch, widths[-1])
    assert jnp.allclose(out, ref, atol=1e-2, rtol=1e-2), \
        "Pallas kernel mismatch vs reference"
    print("KERNEL_OK")
</pallas_src>

<mosaic_0001>
module attributes {stable_mosaic.version = 11 : i64} {
  func.func @_mlp_kernel(%arg0: i32, %arg1: memref<64x64xbf16, #tpu.memory_space<vmem>>, %arg2: memref<64x128xbf16, #tpu.memory_space<vmem>>, %arg3: memref<1x128xf32, #tpu.memory_space<vmem>>, %arg4: memref<128x128xbf16, #tpu.memory_space<vmem>>, %arg5: memref<1x128xf32, #tpu.memory_space<vmem>>, %arg6: memref<128x128xbf16, #tpu.memory_space<vmem>>, %arg7: memref<1x128xf32, #tpu.memory_space<vmem>>, %arg8: memref<64x128xf32, #tpu.memory_space<vmem>>) attributes {dimension_semantics = [#tpu.dimension_semantics<parallel>], iteration_bounds = array<i64: 1>, scalar_prefetch = 0 : i64, scratch_operands = 0 : i64, tpu.core_type = #tpu.core_type<tc>, window_params = [{transform_indices = @transform_0, window_bounds = array<i64: 64, 64>}, {pipeline_mode = #tpu.pipeline_mode<synchronous>, transform_indices = @transform_1, window_bounds = array<i64: 64, 128>}, {pipeline_mode = #tpu.pipeline_mode<synchronous>, transform_indices = @transform_2, window_bounds = array<i64: 1, 128>}, {pipeline_mode = #tpu.pipeline_mode<synchronous>, transform_indices = @transform_3, window_bounds = array<i64: 128, 128>}, {pipeline_mode = #tpu.pipeline_mode<synchronous>, transform_indices = @transform_4, window_bounds = array<i64: 1, 128>}, {pipeline_mode = #tpu.pipeline_mode<synchronous>, transform_indices = @transform_5, window_bounds = array<i64: 128, 128>}, {pipeline_mode = #tpu.pipeline_mode<synchronous>, transform_indices = @transform_6, window_bounds = array<i64: 1, 128>}, {transform_indices = @transform_7, window_bounds = array<i64: 64, 128>}]} {
    %c0 = arith.constant 0 : index
    %c0_0 = arith.constant 0 : index
    %0 = vector.load %arg1[%c0, %c0_0] : memref<64x64xbf16, #tpu.memory_space<vmem>>, vector<64x64xbf16>
    %c0_1 = arith.constant 0 : index
    %c0_2 = arith.constant 0 : index
    %1 = vector.load %arg2[%c0_1, %c0_2] : memref<64x128xbf16, #tpu.memory_space<vmem>>, vector<64x128xbf16>
    %c0_3 = arith.constant 0 : index
    %c0_4 = arith.constant 0 : index
    %2 = vector.load %arg3[%c0_3, %c0_4] : memref<1x128xf32, #tpu.memory_space<vmem>>, vector<1x128xf32>
    %cst = arith.constant dense<0.000000e+00> : vector<64x128xf32>
    %3 = tpu.matmul %0, %1, %cst {dimension_numbers = #tpu.dot_dimension_numbers<[1], [0], [0], [1], [0, 0, 1, 1], [], []>} : vector<64x64xbf16>, vector<64x128xbf16>, vector<64x128xf32> -> vector<64x128xf32>
    %4 = vector.broadcast %2 : vector<1x128xf32> to vector<64x128xf32>
    %5 = arith.addf %3, %4 : vector<64x128xf32>
    %cst_5 = arith.constant 0.000000e+00 : f32
    %6 = vector.broadcast %cst_5 : f32 to vector<64x128xf32>
    %7 = arith.maximumf %5, %6 : vector<64x128xf32>
    %8 = arith.truncf %7 : vector<64x128xf32> to vector<64x128xbf16>
    %c0_6 = arith.constant 0 : index
    %c0_7 = arith.constant 0 : index
    %9 = vector.load %arg4[%c0_6, %c0_7] : memref<128x128xbf16, #tpu.memory_space<vmem>>, vector<128x128xbf16>
    %c0_8 = arith.constant 0 : index
    %c0_9 = arith.constant 0 : index
    %10 = vector.load %arg5[%c0_8, %c0_9] : memref<1x128xf32, #tpu.memory_space<vmem>>, vector<1x128xf32>
    %cst_10 = arith.constant dense<0.000000e+00> : vector<64x128xf32>
    %11 = tpu.matmul %8, %9, %cst_10 {dimension_numbers = #tpu.dot_dimension_numbers<[1], [0], [0], [1], [0, 0, 1, 1], [], []>} : vector<64x128xbf16>, vector<128x128xbf16>, vector<64x128xf32> -> vector<64x128xf32>
    %12 = vector.broadcast %10 : vector<1x128xf32> to vector<64x128xf32>
    %13 = arith.addf %11, %12 : vector<64x128xf32>
    %cst_11 = arith.constant 0.000000e+00 : f32
    %14 = vector.broadcast %cst_11 : f32 to vector<64x128xf32>
    %15 = arith.maximumf %13, %14 : vector<64x128xf32>
    %16 = arith.truncf %15 : vector<64x128xf32> to vector<64x128xbf16>
    %c0_12 = arith.constant 0 : index
    %c0_13 = arith.constant 0 : index
    %17 = vector.load %arg6[%c0_12, %c0_13] : memref<128x128xbf16, #tpu.memory_space<vmem>>, vector<128x128xbf16>
    %c0_14 = arith.constant 0 : index
    %c0_15 = arith.constant 0 : index
    %18 = vector.load %arg7[%c0_14, %c0_15] : memref<1x128xf32, #tpu.memory_space<vmem>>, vector<1x128xf32>
    %cst_16 = arith.constant dense<0.000000e+00> : vector<64x128xf32>
    %19 = tpu.matmul %16, %17, %cst_16 {dimension_numbers = #tpu.dot_dimension_numbers<[1], [0], [0], [1], [0, 0, 1, 1], [], []>} : vector<64x128xbf16>, vector<128x128xbf16>, vector<64x128xf32> -> vector<64x128xf32>
    %20 = vector.broadcast %18 : vector<1x128xf32> to vector<64x128xf32>
    %21 = arith.addf %19, %20 : vector<64x128xf32>
    %22 = arith.negf %21 : vector<64x128xf32>
    %23 = math.exp %22 : vector<64x128xf32>
    %cst_17 = arith.constant 1.000000e+00 : f32
    %24 = vector.broadcast %cst_17 : f32 to vector<64x128xf32>
    %25 = arith.addf %24, %23 : vector<64x128xf32>
    %26 = arith.divf %24, %25 : vector<64x128xf32>
    %c0_18 = arith.constant 0 : index
    %c0_19 = arith.constant 0 : index
    %27 = vector.load %arg8[%c0_18, %c0_19] : memref<64x128xf32, #tpu.memory_space<vmem>>, vector<64x128xf32>
    tpu.vector_store %arg8[%c0_18, %c0_19], %26 {strides = array<i32>} : memref<64x128xf32, #tpu.memory_space<vmem>>, vector<64x128xf32>,
    return
  }
  func.func @transform_0(%arg0: i32) -> (i32, i32) {
    %c0_i32 = arith.constant 0 : i32
    %c0_i32_0 = arith.constant 0 : i32
    return %arg0, %c0_i32 : i32, i32
  }
  func.func @transform_1(%arg0: i32) -> (i32, i32) {
    %c0_i32 = arith.constant 0 : i32
    %c0_i32_0 = arith.constant 0 : i32
    %c0_i32_1 = arith.constant 0 : i32
    return %c0_i32, %c0_i32_0 : i32, i32
  }
  func.func @transform_2(%arg0: i32) -> (i32, i32) {
    %c0_i32 = arith.constant 0 : i32
    %c0_i32_0 = arith.constant 0 : i32
    %c0_i32_1 = arith.constant 0 : i32
    return %c0_i32, %c0_i32_0 : i32, i32
  }
  func.func @transform_3(%arg0: i32) -> (i32, i32) {
    %c0_i32 = arith.constant 0 : i32
    %c0_i32_0 = arith.constant 0 : i32
    %c0_i32_1 = arith.constant 0 : i32
    return %c0_i32, %c0_i32_0 : i32, i32
  }
  func.func @transform_4(%arg0: i32) -> (i32, i32) {
    %c0_i32 = arith.constant 0 : i32
    %c0_i32_0 = arith.constant 0 : i32
    %c0_i32_1 = arith.constant 0 : i32
    return %c0_i32, %c0_i32_0 : i32, i32
  }
  func.func @transform_5(%arg0: i32) -> (i32, i32) {
    %c0_i32 = arith.constant 0 : i32
    %c0_i32_0 = arith.constant 0 : i32
    %c0_i32_1 = arith.constant 0 : i32
    return %c0_i32, %c0_i32_0 : i32, i32
  }
  func.func @transform_6(%arg0: i32) -> (i32, i32) {
    %c0_i32 = arith.constant 0 : i32
    %c0_i32_0 = arith.constant 0 : i32
    %c0_i32_1 = arith.constant 0 : i32
    return %c0_i32, %c0_i32_0 : i32, i32
  }
  func.func @transform_7(%arg0: i32) -> (i32, i32) {
    %c0_i32 = arith.constant 0 : i32
    %c0_i32_0 = arith.constant 0 : i32
    return %arg0, %c0_i32 : i32, i32
  }
}

</mosaic_0001>

<llo_original>
// kernel: tpu_custom_call.1
$region0: #{tpu_custom_call.1}
  #allocation0 [shape = 'u32[]', space=smem, size = 0x4, offset = 0x4, fixed_abs, tag = 'smem constant byte address 0x4 - core index']
  #allocation1 [shape = 'u32[144,128]{1,0:T(1,128)}', space=vmem, size = 0x12000, scoped, tag = 'internal scratch']
  %s0 = inlined_call_operand.hbm [shape: bf16[64,64], index: 0, kind: input, shape index: {}]
  %s1 = inlined_call_operand.hbm [shape: bf16[64,128], index: 1, kind: input, shape index: {}]
  %s2 = inlined_call_operand.vmem [shape: f32[1,128], index: 2, kind: input, shape index: {}]
  %s3 = inlined_call_operand.hbm [shape: bf16[128,128], index: 3, kind: input, shape index: {}]
  %s4 = inlined_call_operand.vmem [shape: f32[1,128], index: 4, kind: input, shape index: {}]
  %s5 = inlined_call_operand.hbm [shape: bf16[128,128], index: 5, kind: input, shape index: {}]
  %s6 = inlined_call_operand.vmem [shape: f32[1,128], index: 6, kind: input, shape index: {}]
  %s7 = inlined_call_operand.hbm [shape: f32[64,128], index: 7, kind: output, shape index: {}]
  %s8 = sld [smem:[#allocation0]]
  $region54: #{tpu_custom_call.1} parent=0
    _
  %s10 = ssub.s32 1, %s8
  %s11 = scalar_select 0, %s10, %s8
  $region1: #{tpu_custom_call.1} parent=0
    #allocation2 [shape = 'u8[16384]{0}', space=vmem, size = 0x4000, scoped, tag = 'input window, operand 0, single buffered']
    #allocation3 [shape = 's32[1]{0}', space=sflag, size = 0x4, scoped, tag = 'scoped memory for tpu_custom_call.1']
    #allocation4 [shape = 's32[1]{0}', space=sflag, size = 0x4, scoped, tag = 'scoped memory for tpu_custom_call.1']
    #allocation5 [shape = 'u8[16384]{0}', space=vmem, size = 0x4000, scoped, tag = 'input window, operand 1, single buffered']
    #allocation6 [shape = 's32[1]{0}', space=sflag, size = 0x4, scoped, tag = 'scoped memory for tpu_custom_call.1']
    #allocation7 [shape = 'u8[32768]{0}', space=vmem, size = 0x8000, scoped, tag = 'input window, operand 3, single buffered']
    #allocation8 [shape = 'u8[32768]{0}', space=vmem, size = 0x8000, scoped, tag = 'input window, operand 5, single buffered']
    #allocation9 [shape = 's32[1]{0}', space=sflag, size = 0x4, scoped, tag = 'scoped memory for tpu_custom_call.1']
    #allocation10 [shape = 'u8[32768]{0}', space=vmem, size = 0x8000, scoped, tag = 'output window, operand 0, single buffered']
    %12 = vsyncpa [#allocation3], 0
    %13 = vsyncpa [#allocation6], 0
    %14 = vsyncpa [#allocation9], 0
    %15 = vsyncpa [#allocation4], 0
    // Predicated region
    $region2: #{tpu_custom_call.1} parent=1 // pred_check
      _
    $region3: #{tpu_custom_call.1} parent=1 // pred_check_branch
      %17 = sbr.rel (0) target = $region5
    $region4: #{tpu_custom_call.1} parent=1 // pred_region
      %s19 = ssub.s32 512, 512
      %20 = vsyncadd [#allocation3], %s19
      %s21 = sshll.u32 [#allocation2], 4
      %s22 = int_to_ptr.vmem [resolvable:$true] %s21
      %27 = dma.hbm_to_vmem [thread:$0]  %s0, 512, %s22, [#allocation3], 64, 64, 4
    $region5: #{tpu_custom_call.1} parent=1 // pred_fallthru
      _
    // Predicated region
    $region6: #{tpu_custom_call.1} parent=1 // pred_check
      _
    $region7: #{tpu_custom_call.1} parent=1 // pred_check_branch
      %29 = sbr.rel (0) target = $region9
    $region8: #{tpu_custom_call.1} parent=1 // pred_region
      %s31 = ssub.s32 512, 512
      %32 = vsyncadd [#allocation6], %s31
      %s33 = sshll.u32 [#allocation5], 4
      %s34 = int_to_ptr.vmem [resolvable:$true] %s33
      %39 = dma.hbm_to_vmem [thread:$0]  %s1, 512, %s34, [#allocation6], 64, 64, 4
    $region9: #{tpu_custom_call.1} parent=1 // pred_fallthru
      _
    // Predicated region
    $region10: #{tpu_custom_call.1} parent=1 // pred_check
      _
    $region11: #{tpu_custom_call.1} parent=1 // pred_check_branch
      %41 = sbr.rel (0) target = $region13
    $region12: #{tpu_custom_call.1} parent=1 // pred_region
      _
    $region13: #{tpu_custom_call.1} parent=1 // pred_fallthru
      _
    // Predicated region
    $region14: #{tpu_custom_call.1} parent=1 // pred_check
      _
    $region15: #{tpu_custom_call.1} parent=1 // pred_check_branch
      %43 = sbr.rel (0) target = $region17
    $region16: #{tpu_custom_call.1} parent=1 // pred_region
      %s45 = ssub.s32 1024, 1024
      %46 = vsyncadd [#allocation6], %s45
      %s47 = sshll.u32 [#allocation7], 4
      %s48 = int_to_ptr.vmem [resolvable:$true] %s47
      %53 = dma.hbm_to_vmem [thread:$0]  %s3, 1024, %s48, [#allocation6], 64, 64, 4
    $region17: #{tpu_custom_call.1} parent=1 // pred_fallthru
      _
    // Predicated region
    $region18: #{tpu_custom_call.1} parent=1 // pred_check
      _
    $region19: #{tpu_custom_call.1} parent=1 // pred_check_branch
      %55 = sbr.rel (0) target = $region21
    $region20: #{tpu_custom_call.1} parent=1 // pred_region
      _
    $region21: #{tpu_custom_call.1} parent=1 // pred_fallthru
      _
    // Predicated region
    $region22: #{tpu_custom_call.1} parent=1 // pred_check
      _
    $region23: #{tpu_custom_call.1} parent=1 // pred_check_branch
      %57 = sbr.rel (0) target = $region25
    $region24: #{tpu_custom_call.1} parent=1 // pred_region
      %s59 = ssub.s32 1024, 1024
      %60 = vsyncadd [#allocation9], %s59
      %s61 = sshll.u32 [#allocation8], 4
      %s62 = int_to_ptr.vmem [resolvable:$true] %s61
      %67 = dma.hbm_to_vmem [thread:$0]  %s5, 1024, %s62, [#allocation9], 64, 64, 4
    $region25: #{tpu_custom_call.1} parent=1 // pred_fallthru
      _
    // Predicated region
    $region26: #{tpu_custom_call.1} parent=1 // pred_check
      _
    $region27: #{tpu_custom_call.1} parent=1 // pred_check_branch
      %69 = sbr.rel (0) target = $region29
    $region28: #{tpu_custom_call.1} parent=1 // pred_region
      _
    $region29: #{tpu_custom_call.1} parent=1 // pred_fallthru
      _
    // Predicated region
    $region30: #{tpu_custom_call.1} parent=1 // pred_check
      _
    $region31: #{tpu_custom_call.1} parent=1 // pred_check_branch
      %71 = sbr.rel (0) target = $region33
    $region32: #{tpu_custom_call.1} parent=1 // pred_region
      %72 = dma.done [#allocation3], 512
    $region33: #{tpu_custom_call.1} parent=1 // pred_fallthru
      _
    // Predicated region
    $region34: #{tpu_custom_call.1} parent=1 // pred_check
      _
    $region35: #{tpu_custom_call.1} parent=1 // pred_check_branch
      %74 = sbr.rel (0) target = $region37
    $region36: #{tpu_custom_call.1} parent=1 // pred_region
      %75 = dma.done [#allocation6], 512
    $region37: #{tpu_custom_call.1} parent=1 // pred_fallthru
      _
    // Predicated region
    $region38: #{tpu_custom_call.1} parent=1 // pred_check
      _
    $region39: #{tpu_custom_call.1} parent=1 // pred_check_branch
      %77 = sbr.rel (0) target = $region41
    $region40: #{tpu_custom_call.1} parent=1 // pred_region
      %78 = dma.done [#allocation6], 1024
    $region41: #{tpu_custom_call.1} parent=1 // pred_fallthru
      _
    // Predicated region
    $region42: #{tpu_custom_call.1} parent=1 // pred_check
      _
    $region43: #{tpu_custom_call.1} parent=1 // pred_check_branch
      %80 = sbr.rel (0) target = $region45
    $region44: #{tpu_custom_call.1} parent=1 // pred_region
      %81 = dma.done [#allocation9], 1024
    $region45: #{tpu_custom_call.1} parent=1 // pred_fallthru
      _
    %v83 = vld [vmem:[#allocation2] sm:$0xf]
    %v84 = vld [vmem:[#allocation2 + $0x4] sm:$0xf]
    %v85 = vld [vmem:[#allocation2 + $0x8] sm:$0xf]
    %v86 = vld [vmem:[#allocation2 + $0xc] sm:$0xf]
    %v87 = vld [vmem:[#allocation2 + $0x10] sm:$0xf]
    %v88 = vld [vmem:[#allocation2 + $0x14] sm:$0xf]
    %v89 = vld [vmem:[#allocation2 + $0x18] sm:$0xf]
    %v90 = vld [vmem:[#allocation2 + $0x1c] sm:$0xf]
    %v91 = vld [vmem:[#allocation5] sm:$0xf]
    %v92 = vld [vmem:[#allocation5 + $0x4] sm:$0xf]
    %v93 = vld [vmem:[#allocation5 + $0x8] sm:$0xf]
    %v94 = vld [vmem:[#allocation5 + $0xc] sm:$0xf]
    %v95 = vld [vmem:[#allocation5 + $0x10] sm:$0xf]
    %v96 = vld [vmem:[#allocation5 + $0x14] sm:$0xf]
    %v97 = vld [vmem:[#allocation5 + $0x18] sm:$0xf]
    %v98 = vld [vmem:[#allocation5 + $0x1c] sm:$0xf]
    %v99 = vld [vmem:[%s2] sm:$0x1]
    %v101 = vlaneseq
    %v102 = vshrl.u32 %v101, 7
    %v103 = vsub.s32 0, %v102
    %v104 = vrot.slane %v99, %v103
    %v114 = vunpack.c.l.b16 %v83
    %v115 = vunpack.c.l.b16 %v84
    %v116 = vunpack.c.l.b16 %v85
    %v117 = vunpack.c.l.b16 %v86
    %v118 = vunpack.c.l.b16 %v87
    %v119 = vunpack.c.l.b16 %v88
    %v120 = vunpack.c.l.b16 %v89
    %v121 = vunpack.c.l.b16 %v90
    %v122 = vpack.c.b16 %v115, %v114
    %v123 = vpack.c.b16 %v117, %v116
    %v124 = vpack.c.b16 %v119, %v118
    %v125 = vpack.c.b16 %v121, %v120
    %v134 = vunpack.c.l.b16 %v91
    %v135 = vunpack.c.l.b16 %v92
    %v136 = vunpack.c.l.b16 %v93
    %v137 = vunpack.c.l.b16 %v94
    %v138 = vunpack.c.l.b16 %v95
    %v139 = vunpack.c.l.b16 %v96
    %v140 = vunpack.c.l.b16 %v97
    %v141 = vunpack.c.l.b16 %v98
    %v142 = vpack.c.b16 %v135, %v134
    %v143 = vpack.c.b16 %v137, %v136
    %v144 = vpack.c.b16 %v139, %v138
    %v145 = vpack.c.b16 %v141, %v140
    %vm150 = vcmask 523264
    %v152 = vsel %vm150, %v122, 0
    %v155 = vsel %vm150, %v123, 0
    %v158 = vsel %vm150, %v124, 0
    %v161 = vsel %vm150, %v125, 0
    %163 = vmatprep.subr.bf16.mxu0 0
    %164 = vmatpush1.bf16.msra.mxu0 %v142
    %165 = vmatprep.subr.bf16.mxu0 0
    %166 = vmatpush1.bf16.msra.mxu0 %v143
    %167 = vmatprep.subr.bf16.mxu0 0
    %168 = vmatpush1.bf16.msra.mxu0 %v144
    %169 = vmatprep.subr.bf16.mxu0 0
    %170 = vmatpush1.bf16.msra.mxu0 %v145
    %171 = vmatprep.subr.bf16.mxu0 0
    %172 = vmatpush1.bf16.msra.mxu0 0
    %173 = vmatprep.subr.bf16.mxu0 0
    %174 = vmatpush1.bf16.msra.mxu0 0
    %175 = vmatprep.subr.bf16.mxu0 0
    %176 = vmatpush1.bf16.msra.mxu0 0
    %177 = vmatprep.subr.bf16.mxu0 0
    %178 = vmatpush1.bf16.msra.mxu0 0
    %179 = vmatprep.subr.bf16.mxu0 0
    %180 = vmatpush1.bf16.msra.mxu0 0
    %181 = vmatprep.subr.bf16.mxu0 0
    %182 = vmatpush1.bf16.msra.mxu0 0
    %183 = vmatprep.subr.bf16.mxu0 0
    %184 = vmatpush1.bf16.msra.mxu0 0
    %185 = vmatprep.subr.bf16.mxu0 0
    %186 = vmatpush1.bf16.msra.mxu0 0
    %187 = vmatprep.subr.bf16.mxu0 0
    %188 = vmatpush1.bf16.msra.mxu0 0
    %189 = vmatprep.subr.bf16.mxu0 0
    %190 = vmatpush1.bf16.msra.mxu0 0
    %191 = vmatprep.subr.bf16.mxu0 0
    %192 = vmatpush1.bf16.msra.mxu0 0
    %193 = vmatprep.subr.bf16.mxu0 0
    %194 = vmatpush1.bf16.msra.mxu0 0
    %195 = vmatprep.mubr.bf16.mxu0 0
    %196 = vmatmul.mubr.bf16.gmra.mrb[0].mxu0 %v152
    %v197 = vpop.f32.mrb[0].mxu0
    %v198 = vadd.f32 %v104, %v197
    %v199 = vpop.f32.mrb[0].mxu0
    %v200 = vpop.f32.mrb[0].mxu0
    %v201 = vadd.f32 %v104, %v200
    %v202 = vpop.f32.mrb[0].mxu0
    %203 = vmatprep.mubr.bf16.mxu0 0
    %204 = vmatmul.mubr.bf16.gmra.mrb[0].mxu0 %v155
    %v205 = vpop.f32.mrb[0].mxu0
    %v206 = vadd.f32 %v104, %v205
    %v207 = vpop.f32.mrb[0].mxu0
    %v208 = vpop.f32.mrb[0].mxu0
    %v209 = vadd.f32 %v104, %v208
    %v210 = vpop.f32.mrb[0].mxu0
    %211 = vmatprep.mubr.bf16.mxu0 0
    %212 = vmatmul.mubr.bf16.gmra.mrb[0].mxu0 %v158
    %v213 = vpop.f32.mrb[0].mxu0
    %v214 = vadd.f32 %v104, %v213
    %v215 = vpop.f32.mrb[0].mxu0
    %v216 = vpop.f32.mrb[0].mxu0
    %v217 = vadd.f32 %v104, %v216
    %v218 = vpop.f32.mrb[0].mxu0
    %219 = vmatprep.mubr.bf16.mxu0 0
    %220 = vmatmul.mubr.bf16.gmra.mrb[0].mxu0 %v161
    %v221 = vpop.f32.mrb[0].mxu0
    %v222 = vadd.f32 %v104, %v221
    %v223 = vpop.f32.mrb[0].mxu0
    %v224 = vpop.f32.mrb[0].mxu0
    %v225 = vadd.f32 %v104, %v224
    %v226 = vpop.f32.mrb[0].mxu0
    %227 = vdwg.mxu0
    %v228 = vmax.f32 %v198, 0.0
    %v229 = vmax.f32 %v201, 0.0
    %v230 = vmax.f32 %v206, 0.0
    %v231 = vmax.f32 %v209, 0.0
    %v232 = vmax.f32 %v214, 0.0
    %v233 = vmax.f32 %v217, 0.0
    %v234 = vmax.f32 %v222, 0.0
    %v235 = vmax.f32 %v225, 0.0
    %v236 = vpack.c.bf16 %v229, %v228
    %v237 = vpack.c.bf16 %v231, %v230
    %v238 = vpack.c.bf16 %v233, %v232
    %v239 = vpack.c.bf16 %v235, %v234
    %v240 = vld [vmem:[#allocation7] sm:$0xf]
    %v241 = vld [vmem:[#allocation7 + $0x4] sm:$0xf]
    %v242 = vld [vmem:[#allocation7 + $0x8] sm:$0xf]
    %v243 = vld [vmem:[#allocation7 + $0xc] sm:$0xf]
    %v244 = vld [vmem:[#allocation7 + $0x10] sm:$0xf]
    %v245 = vld [vmem:[#allocation7 + $0x14] sm:$0xf]
    %v246 = vld [vmem:[#allocation7 + $0x18] sm:$0xf]
    %v247 = vld [vmem:[#allocation7 + $0x1c] sm:$0xf]
    %v248 = vld [vmem:[#allocation7 + $0x20] sm:$0xf]
    %v249 = vld [vmem:[#allocation7 + $0x24] sm:$0xf]
    %v250 = vld [vmem:[#allocation7 + $0x28] sm:$0xf]
    %v251 = vld [vmem:[#allocation7 + $0x2c] sm:$0xf]
    %v252 = vld [vmem:[#allocation7 + $0x30] sm:$0xf]
    %v253 = vld [vmem:[#allocation7 + $0x34] sm:$0xf]
    %v254 = vld [vmem:[#allocation7 + $0x38] sm:$0xf]
    %v255 = vld [vmem:[#allocation7 + $0x3c] sm:$0xf]
    %v256 = vld [vmem:[%s4] sm:$0x1]
    %v258 = vlaneseq
    %v259 = vshrl.u32 %v258, 7
    %v260 = vsub.s32 0, %v259
    %v261 = vrot.slane %v256, %v260
    %v279 = vunpack.c.l.b16 %v240
    %v280 = vunpack.c.l.b16 %v241
    %v281 = vunpack.c.l.b16 %v242
    %v282 = vunpack.c.l.b16 %v243
    %v283 = vunpack.c.l.b16 %v244
    %v284 = vunpack.c.l.b16 %v245
    %v285 = vunpack.c.l.b16 %v246
    %v286 = vunpack.c.l.b16 %v247
    %v287 = vunpack.c.l.b16 %v248
    %v288 = vunpack.c.l.b16 %v249
    %v289 = vunpack.c.l.b16 %v250
    %v290 = vunpack.c.l.b16 %v251
    %v291 = vunpack.c.l.b16 %v252
    %v292 = vunpack.c.l.b16 %v253
    %v293 = vunpack.c.l.b16 %v254
    %v294 = vunpack.c.l.b16 %v255
    %v295 = vpack.c.b16 %v280, %v279
    %v296 = vpack.c.b16 %v282, %v281
    %v297 = vpack.c.b16 %v284, %v283
    %v298 = vpack.c.b16 %v286, %v285
    %v299 = vpack.c.b16 %v288, %v287
    %v300 = vpack.c.b16 %v290, %v289
    %v301 = vpack.c.b16 %v292, %v291
    %v302 = vpack.c.b16 %v294, %v293
    %311 = vmatprep.subr.bf16.mxu0 0
    %312 = vmatpush1.bf16.msra.mxu0 %v295
    %313 = vmatprep.subr.bf16.mxu0 0
    %314 = vmatpush1.bf16.msra.mxu0 %v296
    %315 = vmatprep.subr.bf16.mxu0 0
    %316 = vmatpush1.bf16.msra.mxu0 %v297
    %317 = vmatprep.subr.bf16.mxu0 0
    %318 = vmatpush1.bf16.msra.mxu0 %v298
    %319 = vmatprep.subr.bf16.mxu0 0
    %320 = vmatpush1.bf16.msra.mxu0 %v299
    %321 = vmatprep.subr.bf16.mxu0 0
    %322 = vmatpush1.bf16.msra.mxu0 %v300
    %323 = vmatprep.subr.bf16.mxu0 0
    %324 = vmatpush1.bf16.msra.mxu0 %v301
    %325 = vmatprep.subr.bf16.mxu0 0
    %326 = vmatpush1.bf16.msra.mxu0 %v302
    %327 = vmatprep.subr.bf16.mxu0 0
    %328 = vmatpush1.bf16.msra.mxu0 0
    %329 = vmatprep.subr.bf16.mxu0 0
    %330 = vmatpush1.bf16.msra.mxu0 0
    %331 = vmatprep.subr.bf16.mxu0 0
    %332 = vmatpush1.bf16.msra.mxu0 0
    %333 = vmatprep.subr.bf16.mxu0 0
    %334 = vmatpush1.bf16.msra.mxu0 0
    %335 = vmatprep.subr.bf16.mxu0 0
    %336 = vmatpush1.bf16.msra.mxu0 0
    %337 = vmatprep.subr.bf16.mxu0 0
    %338 = vmatpush1.bf16.msra.mxu0 0
    %339 = vmatprep.subr.bf16.mxu0 0
    %340 = vmatpush1.bf16.msra.mxu0 0
    %341 = vmatprep.subr.bf16.mxu0 0
    %342 = vmatpush1.bf16.msra.mxu0 0
    %343 = vmatprep.mubr.bf16.mxu0 0
    %344 = vmatmul.mubr.bf16.gmra.mrb[0].mxu0 %v236
    %v345 = vpop.f32.mrb[0].mxu0
    %v346 = vadd.f32 %v261, %v345
    %v347 = vpop.f32.mrb[0].mxu0
    %v348 = vpop.f32.mrb[0].mxu0
    %v349 = vadd.f32 %v261, %v348
    %v350 = vpop.f32.mrb[0].mxu0
    %351 = vmatprep.mubr.bf16.mxu0 0
    %352 = vmatmul.mubr.bf16.gmra.mrb[0].mxu0 %v237
    %v353 = vpop.f32.mrb[0].mxu0
    %v354 = vadd.f32 %v261, %v353
    %v355 = vpop.f32.mrb[0].mxu0
    %v356 = vpop.f32.mrb[0].mxu0
    %v357 = vadd.f32 %v261, %v356
    %v358 = vpop.f32.mrb[0].mxu0
    %359 = vmatprep.mubr.bf16.mxu0 0
    %360 = vmatmul.mubr.bf16.gmra.mrb[0].mxu0 %v238
    %v361 = vpop.f32.mrb[0].mxu0
    %v362 = vadd.f32 %v261, %v361
    %v363 = vpop.f32.mrb[0].mxu0
    %v364 = vpop.f32.mrb[0].mxu0
    %v365 = vadd.f32 %v261, %v364
    %v366 = vpop.f32.mrb[0].mxu0
    %367 = vmatprep.mubr.bf16.mxu0 0
    %368 = vmatmul.mubr.bf16.gmra.mrb[0].mxu0 %v239
    %v369 = vpop.f32.mrb[0].mxu0
    %v370 = vadd.f32 %v261, %v369
    %v371 = vpop.f32.mrb[0].mxu0
    %v372 = vpop.f32.mrb[0].mxu0
    %v373 = vadd.f32 %v261, %v372
    %v374 = vpop.f32.mrb[0].mxu0
    %375 = vdwg.mxu0
    %v376 = vmax.f32 %v346, 0.0
    %v377 = vmax.f32 %v349, 0.0
    %v378 = vmax.f32 %v354, 0.0
    %v379 = vmax.f32 %v357, 0.0
    %v380 = vmax.f32 %v362, 0.0
    %v381 = vmax.f32 %v365, 0.0
    %v382 = vmax.f32 %v370, 0.0
    %v383 = vmax.f32 %v373, 0.0
    %v384 = vpack.c.bf16 %v377, %v376
    %v385 = vpack.c.bf16 %v379, %v378
    %v386 = vpack.c.bf16 %v381, %v380
    %v387 = vpack.c.bf16 %v383, %v382
    %v388 = vld [vmem:[#allocation8] sm:$0xf]
    %v389 = vld [vmem:[#allocation8 + $0x4] sm:$0xf]
    %v390 = vld [vmem:[#allocation8 + $0x8] sm:$0xf]
    %v391 = vld [vmem:[#allocation8 + $0xc] sm:$0xf]
    %v392 = vld [vmem:[#allocation8 + $0x10] sm:$0xf]
    %v393 = vld [vmem:[#allocation8 + $0x14] sm:$0xf]
    %v394 = vld [vmem:[#allocation8 + $0x18] sm:$0xf]
    %v395 = vld [vmem:[#allocation8 + $0x1c] sm:$0xf]
    %v396 = vld [vmem:[#allocation8 + $0x20] sm:$0xf]
    %v397 = vld [vmem:[#allocation8 + $0x24] sm:$0xf]
    %v398 = vld [vmem:[#allocation8 + $0x28] sm:$0xf]
    %v399 = vld [vmem:[#allocation8 + $0x2c] sm:$0xf]
    %v400 = vld [vmem:[#allocation8 + $0x30] sm:$0xf]
    %v401 = vld [vmem:[#allocation8 + $0x34] sm:$0xf]
    %v402 = vld [vmem:[#allocation8 + $0x38] sm:$0xf]
    %v403 = vld [vmem:[#allocation8 + $0x3c] sm:$0xf]
    %v404 = vld [vmem:[%s6] sm:$0x1]
    %v406 = vlaneseq
    %v407 = vshrl.u32 %v406, 7
    %v408 = vsub.s32 0, %v407
    %v409 = vrot.slane %v404, %v408
    %v427 = vunpack.c.l.b16 %v388
    %v428 = vunpack.c.l.b16 %v389
    %v429 = vunpack.c.l.b16 %v390
    %v430 = vunpack.c.l.b16 %v391
    %v431 = vunpack.c.l.b16 %v392
    %v432 = vunpack.c.l.b16 %v393
    %v433 = vunpack.c.l.b16 %v394
    %v434 = vunpack.c.l.b16 %v395
    %v435 = vunpack.c.l.b16 %v396
    %v436 = vunpack.c.l.b16 %v397
    %v437 = vunpack.c.l.b16 %v398
    %v438 = vunpack.c.l.b16 %v399
    %v439 = vunpack.c.l.b16 %v400
    %v440 = vunpack.c.l.b16 %v401
    %v441 = vunpack.c.l.b16 %v402
    %v442 = vunpack.c.l.b16 %v403
    %v443 = vpack.c.b16 %v428, %v427
    %v444 = vpack.c.b16 %v430, %v429
    %v445 = vpack.c.b16 %v432, %v431
    %v446 = vpack.c.b16 %v434, %v433
    %v447 = vpack.c.b16 %v436, %v435
    %v448 = vpack.c.b16 %v438, %v437
    %v449 = vpack.c.b16 %v440, %v439
    %v450 = vpack.c.b16 %v442, %v441
    %459 = vmatprep.subr.bf16.mxu0 0
    %460 = vmatpush1.bf16.msra.mxu0 %v443
    %461 = vmatprep.subr.bf16.mxu0 0
    %462 = vmatpush1.bf16.msra.mxu0 %v444
    %463 = vmatprep.subr.bf16.mxu0 0
    %464 = vmatpush1.bf16.msra.mxu0 %v445
    %465 = vmatprep.subr.bf16.mxu0 0
    %466 = vmatpush1.bf16.msra.mxu0 %v446
    %467 = vmatprep.subr.bf16.mxu0 0
    %468 = vmatpush1.bf16.msra.mxu0 %v447
    %469 = vmatprep.subr.bf16.mxu0 0
    %470 = vmatpush1.bf16.msra.mxu0 %v448
    %471 = vmatprep.subr.bf16.mxu0 0
    %472 = vmatpush1.bf16.msra.mxu0 %v449
    %473 = vmatprep.subr.bf16.mxu0 0
    %474 = vmatpush1.bf16.msra.mxu0 %v450
    %475 = vmatprep.subr.bf16.mxu0 0
    %476 = vmatpush1.bf16.msra.mxu0 0
    %477 = vmatprep.subr.bf16.mxu0 0
    %478 = vmatpush1.bf16.msra.mxu0 0
    %479 = vmatprep.subr.bf16.mxu0 0
    %480 = vmatpush1.bf16.msra.mxu0 0
    %481 = vmatprep.subr.bf16.mxu0 0
    %482 = vmatpush1.bf16.msra.mxu0 0
    %483 = vmatprep.subr.bf16.mxu0 0
    %484 = vmatpush1.bf16.msra.mxu0 0
    %485 = vmatprep.subr.bf16.mxu0 0
    %486 = vmatpush1.bf16.msra.mxu0 0
    %487 = vmatprep.subr.bf16.mxu0 0
    %488 = vmatpush1.bf16.msra.mxu0 0
    %489 = vmatprep.subr.bf16.mxu0 0
    %490 = vmatpush1.bf16.msra.mxu0 0
    %491 = vmatprep.mubr.bf16.mxu0 0
    %492 = vmatmul.mubr.bf16.gmra.mrb[0].mxu0 %v384
    %v493 = vpop.f32.mrb[0].mxu0
    %v494 = vadd.f32 %v409, %v493
    %v495 = vpop.f32.mrb[0].mxu0
    %v496 = vpop.f32.mrb[0].mxu0
    %v497 = vadd.f32 %v409, %v496
    %v498 = vpop.f32.mrb[0].mxu0
    %499 = vmatprep.mubr.bf16.mxu0 0
    %500 = vmatmul.mubr.bf16.gmra.mrb[0].mxu0 %v385
    %v501 = vpop.f32.mrb[0].mxu0
    %v502 = vadd.f32 %v409, %v501
    %v503 = vpop.f32.mrb[0].mxu0
    %v504 = vpop.f32.mrb[0].mxu0
    %v505 = vadd.f32 %v409, %v504
    %v506 = vpop.f32.mrb[0].mxu0
    %507 = vmatprep.mubr.bf16.mxu0 0
    %508 = vmatmul.mubr.bf16.gmra.mrb[0].mxu0 %v386
    %v509 = vpop.f32.mrb[0].mxu0
    %v510 = vadd.f32 %v409, %v509
    %v511 = vpop.f32.mrb[0].mxu0
    %v512 = vpop.f32.mrb[0].mxu0
    %v513 = vadd.f32 %v409, %v512
    %v514 = vpop.f32.mrb[0].mxu0
    %515 = vmatprep.mubr.bf16.mxu0 0
    %516 = vmatmul.mubr.bf16.gmra.mrb[0].mxu0 %v387
    %v517 = vpop.f32.mrb[0].mxu0
    %v518 = vadd.f32 %v409, %v517
    %v519 = vpop.f32.mrb[0].mxu0
    %v520 = vpop.f32.mrb[0].mxu0
    %v521 = vadd.f32 %v409, %v520
    %v522 = vpop.f32.mrb[0].mxu0
    %523 = vdwg.mxu0
    %v524 = vxor.u32 %v494, 2147483648
    %v525 = vxor.u32 %v497, 2147483648
    %v526 = vxor.u32 %v502, 2147483648
    %v527 = vxor.u32 %v505, 2147483648
    %v528 = vxor.u32 %v510, 2147483648
    %v529 = vxor.u32 %v513, 2147483648
    %v530 = vxor.u32 %v518, 2147483648
    %v531 = vxor.u32 %v521, 2147483648
    %v532 = vmul.f32 %v524, 1.442695
    %v533 = vpow.pop %v532
    %v534 = vmul.f32 %v525, 1.442695
    %v535 = vpow.pop %v534
    %v536 = vmul.f32 %v526, 1.442695
    %v537 = vpow.pop %v536
    %v538 = vmul.f32 %v527, 1.442695
    %v539 = vpow.pop %v538
    %v540 = vmul.f32 %v528, 1.442695
    %v541 = vpow.pop %v540
    %v542 = vmul.f32 %v529, 1.442695
    %v543 = vpow.pop %v542
    %v544 = vmul.f32 %v530, 1.442695
    %v545 = vpow.pop %v544
    %v546 = vmul.f32 %v531, 1.442695
    %v547 = vpow.pop %v546
    %v548 = vadd.f32 %v533, 1.0
    %v549 = vadd.f32 %v535, 1.0
    %v550 = vadd.f32 %v537, 1.0
    %v551 = vadd.f32 %v539, 1.0
    %v552 = vadd.f32 %v541, 1.0
    %v553 = vadd.f32 %v543, 1.0
    %v554 = vadd.f32 %v545, 1.0
    %v555 = vadd.f32 %v547, 1.0
    %v556 = vrcp.pop %v548
    %v557 = vmul.f32 1.0, %v556
    %v558 = vrcp.pop %v549
    %v559 = vmul.f32 1.0, %v558
    %v560 = vrcp.pop %v550
    %v561 = vmul.f32 1.0, %v560
    %v562 = vrcp.pop %v551
    %v563 = vmul.f32 1.0, %v562
    %v564 = vrcp.pop %v552
    %v565 = vmul.f32 1.0, %v564
    %v566 = vrcp.pop %v553
    %v567 = vmul.f32 1.0, %v566
    %v568 = vrcp.pop %v554
    %v569 = vmul.f32 1.0, %v568
    %v570 = vrcp.pop %v555
    %v571 = vmul.f32 1.0, %v570
    %572 = vst [vmem:[#allocation10] sm:$0xff] %v557
    %573 = vst [vmem:[#allocation10 + $0x8] sm:$0xff] %v559
    %574 = vst [vmem:[#allocation10 + $0x10] sm:$0xff] %v561
    %575 = vst [vmem:[#allocation10 + $0x18] sm:$0xff] %v563
    %576 = vst [vmem:[#allocation10 + $0x20] sm:$0xff] %v565
    %577 = vst [vmem:[#allocation10 + $0x28] sm:$0xff] %v567
    %578 = vst [vmem:[#allocation10 + $0x30] sm:$0xff] %v569
    %579 = vst [vmem:[#allocation10 + $0x38] sm:$0xff] %v571
    // Predicated region
    $region46: #{tpu_custom_call.1} parent=1 // pred_check
      _
    $region47: #{tpu_custom_call.1} parent=1 // pred_check_branch
      %581 = sbr.rel (0) target = $region49
    $region48: #{tpu_custom_call.1} parent=1 // pred_region
      %s583 = ssub.s32 1024, 1024
      %584 = vsyncadd [#allocation4], %s583
      %s585 = sshll.u32 [#allocation10], 4
      %s586 = int_to_ptr.vmem [resolvable:$true] %s585
      %591 = dma.vmem_to_hbm [thread:$0]  %s586, 1024, %s7, [#allocation4], 128, 128, 8
    $region49: #{tpu_custom_call.1} parent=1 // pred_fallthru
      _
    // Predicated region
    $region50: #{tpu_custom_call.1} parent=1 // pred_check
      _
    $region51: #{tpu_custom_call.1} parent=1 // pred_check_branch
      %593 = sbr.rel (0) target = $region53
    $region52: #{tpu_custom_call.1} parent=1 // pred_region
      %594 = dma.done [#allocation4], 1024
    $region53: #{tpu_custom_call.1} parent=1 // pred_fallthru
      _
    %595 = vsyncpa [#allocation3], 1
    %596 = vsyncpa [#allocation6], 1
    %597 = vsyncpa [#allocation9], 1
    %598 = vsyncpa [#allocation4], 1

</llo_original>
